<compile_context>
chip_gen: v7x
topology: tpu7x:2x2x1
jax: 0.10.0
libtpu: 0.0.40
codegen_flags: <defaults>
</compile_context>

<pallas_src>
import jax
import jax.numpy as jnp
from jax.experimental import pallas as pl
from jax.experimental.pallas import tpu as pltpu

INPUT_SIZE = 32
H1 = 128
H2 = 128
H3 = 64
H3_PAD = 128                    # lane-pad fc3 so its activations are vreg aligned
OUT = 1
BN_EPS = 1e-5
W_ROWS = INPUT_SIZE + H1 + H2   # 288 rows in the concatenated weight slab
V_ROWS = 8                      # t1 / t2 / t3 / w4 / b4 (+3 zero rows, sublane pad)


def _round_up(n: int, m: int) -> int:
    return ((n + m - 1) // m) * m


# ----------------------------------------------------------------------------
# Kernel
# ----------------------------------------------------------------------------
def mlp_kernel(x_ref, wcat_ref, vcat_ref, o_ref):
    x = x_ref[...]                                              # (tb, 32) bf16

    # fc1 (bn1 scale pre-folded into the weight columns) -> +shift -> relu
    h1 = jnp.dot(x, wcat_ref[0:INPUT_SIZE, :],
                 preferred_element_type=jnp.float32)
    h1 = jnp.maximum(h1 + vcat_ref[0:1, :], 0.0)                # (tb, 128) f32

    # fc2 -> +shift -> relu -> residual add (elementwise stays f32)
    h2 = jnp.dot(h1.astype(jnp.bfloat16),
                 wcat_ref[INPUT_SIZE:INPUT_SIZE + H1, :],
                 preferred_element_type=jnp.float32)
    h2 = jnp.maximum(h2 + vcat_ref[1:2, :], 0.0) + h1

    # fc3 (width padded to 128; pad columns are exactly 0) -> +shift -> relu
    h3 = jnp.dot(h2.astype(jnp.bfloat16),
                 wcat_ref[INPUT_SIZE + H1:W_ROWS, :],
                 preferred_element_type=jnp.float32)
    h3 = jnp.maximum(h3 + vcat_ref[2:3, :], 0.0)

    # fc4 (N=1 linear) as VPU multiply + lane reduction (MXU stays free)
    out = jnp.sum(h3 * vcat_ref[3:4, :], axis=-1, keepdims=True)
    out = out + vcat_ref[4:5, 0:1]                              # + b4
    o_ref[...] = out.astype(o_ref.dtype)


# ----------------------------------------------------------------------------
# Batch-tile selection
# ----------------------------------------------------------------------------
def _choose_batch_tile(B: int, tb_max: int):
    """Pick the batch tile (multiple of 128).

    * capped at tb_max (review: 1024-2048 captures most of the tile curve),
    * capped at ceil(nblk/2) blocks so the 1-D grid has >= 2 steps whenever
      possible and both v7x TensorCores get work (harmless on v5e/v6e),
    * chosen to minimise  3*grid_steps + wasted_128row_blocks, so unlucky
      batch sizes no longer pay almost a full dead tile of MXU/VPU work.
    """
    nblk = pl.cdiv(B, 128)                       # 128-row blocks after padding
    cap = max(1, min(tb_max // 128, pl.cdiv(nblk, 2) if nblk > 1 else 1))
    best_t, best_cost = 1, None
    for t in range(1, cap + 1):
        steps = pl.cdiv(nblk, t)
        waste = steps * t - nblk                 # dead 128-row blocks of compute
        cost = 3 * steps + waste                 # per-step overhead >> per-block pad work here
        if best_cost is None or cost <= best_cost:
            best_t, best_cost = t, cost
    tb_eff = best_t * 128
    b_pad = pl.cdiv(nblk, best_t) * tb_eff
    return tb_eff, b_pad


# ----------------------------------------------------------------------------
# Wrapper
# ----------------------------------------------------------------------------
def neural_network_forward(x, kernel_params, *, tb=1024):
    """x: (B, INPUT_SIZE) float32.  Returns (B, 1) float32 (eval-mode forward)."""
    B, D = x.shape
    assert D == INPUT_SIZE
    wcat, vcat = kernel_params

    tb_eff, b_pad = _choose_batch_tile(B, tb)
    if b_pad != B:
        x = jnp.pad(x, ((0, b_pad - B), (0, 0)))
    x = x.astype(jnp.bfloat16)

    grid = (b_pad // tb_eff,)

    flops = 2 * b_pad * (INPUT_SIZE * H1 + H1 * H2 + H2 * H3_PAD + H3_PAD)
    param_bytes = int(wcat.size) * wcat.dtype.itemsize + int(vcat.size) * vcat.dtype.itemsize
    cost = pl.CostEstimate(
        flops=flops,
        transcendentals=0,
        bytes_accessed=b_pad * (INPUT_SIZE * 2 + OUT * 4) + param_bytes)

    out = pl.pallas_call(
        mlp_kernel,
        out_shape=jax.ShapeDtypeStruct((b_pad, OUT), jnp.float32),
        grid_spec=pltpu.PrefetchScalarGridSpec(
            num_scalar_prefetch=0,
            grid=grid,
            in_specs=[
                # activations: tiled over the batch, full feature width
                pl.BlockSpec((tb_eff, INPUT_SIZE), lambda i: (i, 0)),
                # parameter slabs: same constant-index full block every step
                pl.BlockSpec((W_ROWS, H3_PAD), lambda i: (0, 0)),
                pl.BlockSpec((V_ROWS, H3_PAD), lambda i: (0, 0)),
            ],
            out_specs=pl.BlockSpec((tb_eff, OUT), lambda i: (i, 0)),
        ),
        compiler_params=pltpu.CompilerParams(
            dimension_semantics=("parallel",),
            vmem_limit_bytes=32 * 1024 * 1024),
        cost_estimate=cost,
    )(x, wcat, vcat)
    return out[:B]


# ----------------------------------------------------------------------------
# Parameter construction (matches the PyTorch module __init__) and packing.
# ----------------------------------------------------------------------------
def init_torch_params(key):
    """Params exactly as the PyTorch module produces them.

    nn.Linear: kaiming_normal_(fan_in, relu) -> std = sqrt(2/fan_in), bias = 0.
    nn.BatchNorm1d: gamma=1, beta=0, running_mean=0, running_var=1.
    Linear weights stored transposed as (in, out) so the forward is x @ W.
    """
    ks = jax.random.split(key, 4)

    def kaiming(k, fan_in, fan_out):
        std = jnp.sqrt(2.0 / fan_in).astype(jnp.float32)
        w = jax.random.normal(k, (fan_out, fan_in), dtype=jnp.float32) * std
        return w.T  # (in, out)

    def bn(c):
        return dict(gamma=jnp.ones((c,), jnp.float32),
                    beta=jnp.zeros((c,), jnp.float32),
                    mean=jnp.zeros((c,), jnp.float32),
                    var=jnp.ones((c,), jnp.float32))

    return dict(
        w1=kaiming(ks[0], INPUT_SIZE, H1), b1=jnp.zeros((H1,), jnp.float32), bn1=bn(H1),
        w2=kaiming(ks[1], H1, H2),         b2=jnp.zeros((H2,), jnp.float32), bn2=bn(H2),
        w3=kaiming(ks[2], H2, H3),         b3=jnp.zeros((H3,), jnp.float32), bn3=bn(H3),
        w4=kaiming(ks[3], H3, OUT),        b4=jnp.zeros((OUT,), jnp.float32),
    )


def randomize_bn_and_bias(p, key):
    """Non-trivial BN stats / biases to exercise the fold path (same forward fn)."""
    ks = jax.random.split(key, 12)
    i = 0
    out = dict(p)
    for name, c in (("bn1", H1), ("bn2", H2), ("bn3", H3)):
        out[name] = dict(
            gamma=1.0 + 0.1 * jax.random.normal(ks[i + 0], (c,), jnp.float32),
            beta=0.1 * jax.random.normal(ks[i + 1], (c,), jnp.float32),
            mean=0.1 * jax.random.normal(ks[i + 2], (c,), jnp.float32),
            var=jax.random.uniform(ks[i + 3], (c,), jnp.float32, 0.5, 1.5))
        i += 4
    out["b1"] = 0.05 * jax.random.normal(ks[0], (H1,), jnp.float32)
    out["b2"] = 0.05 * jax.random.normal(ks[4], (H2,), jnp.float32)
    out["b3"] = 0.05 * jax.random.normal(ks[8], (H3,), jnp.float32)
    out["b4"] = 0.05 * jax.random.normal(ks[11], (OUT,), jnp.float32)
    return out


def _fold_bn(bias, bn):
    scale = bn["gamma"] / jnp.sqrt(bn["var"] + BN_EPS)      # per-feature mul
    shift = (bias - bn["mean"]) * scale + bn["beta"]        # per-feature add
    return scale, shift


def pack_kernel_params(p):
    """Fold eval-mode BN + bias into the weights/shifts and pack into 2 arrays:

      wcat (288, 128) bf16 : rows [0:32)=w1*s1, [32:160)=w2*s2, [160:288)=w3*s3
                             (fc3 columns zero-padded 64->128).
      vcat (8, 128)  f32   : rows 0..2 = shifts t1/t2/t3(pad 0), row 3 = w4 (pad 0),
                             row 4 = b4 broadcast, rows 5..7 = 0 (sublane pad).

    Scale folding is done in f32 before the bf16 cast.
    """
    s1, t1 = _fold_bn(p["b1"], p["bn1"])
    s2, t2 = _fold_bn(p["b2"], p["bn2"])
    s3, t3 = _fold_bn(p["b3"], p["bn3"])

    pad = H3_PAD - H3
    w1f = p["w1"] * s1[None, :]                                   # (32, 128) f32
    w2f = p["w2"] * s2[None, :]                                   # (128, 128)
    w3f = jnp.pad(p["w3"] * s3[None, :], ((0, 0), (0, pad)))      # (128, 128)
    wcat = jnp.concatenate([w1f, w2f, w3f], axis=0).astype(jnp.bfloat16)

    t3p = jnp.pad(t3, (0, pad))
    w4row = jnp.pad(p["w4"][:, 0], (0, pad))
    b4row = jnp.full((H3_PAD,), p["b4"][0], jnp.float32)
    zrow = jnp.zeros((H3_PAD,), jnp.float32)
    vcat = jnp.stack([t1, t2, t3p, w4row, b4row, zrow, zrow, zrow], axis=0)
    return wcat, vcat


# ----------------------------------------------------------------------------
# Pure-JAX references for correctness checks.
# ----------------------------------------------------------------------------
def _bn_eval(h, bias, stats):
    h = h + bias
    return ((h - stats["mean"]) / jnp.sqrt(stats["var"] + BN_EPS)
            * stats["gamma"] + stats["beta"])


def reference_forward_f32(x, p):
    """Faithful full-f32 eval-mode forward of the PyTorch module."""
    h1 = jnp.maximum(_bn_eval(x @ p["w1"], p["b1"], p["bn1"]), 0.0)
    h2 = jnp.maximum(_bn_eval(h1 @ p["w2"], p["b2"], p["bn2"]), 0.0) + h1
    h3 = jnp.maximum(_bn_eval(h2 @ p["w3"], p["b3"], p["bn3"]), 0.0)
    return h3 @ p["w4"] + p["b4"]


def reference_forward_kernel_math(x, p):
    """Same forward with the kernel's exact math: BN scale folded into the
    weights before the bf16 cast, bf16-in / f32-accumulate matmuls."""
    s1, t1 = _fold_bn(p["b1"], p["bn1"])
    s2, t2 = _fold_bn(p["b2"], p["bn2"])
    s3, t3 = _fold_bn(p["b3"], p["bn3"])

    def dot(a, w):
        return jnp.dot(a.astype(jnp.bfloat16), w.astype(jnp.bfloat16),
                       preferred_element_type=jnp.float32)

    h1 = jnp.maximum(dot(x, p["w1"] * s1[None, :]) + t1, 0.0)
    h2 = jnp.maximum(dot(h1, p["w2"] * s2[None, :]) + t2, 0.0) + h1
    h3 = jnp.maximum(dot(h2, p["w3"] * s3[None, :]) + t3, 0.0)
    return h3 @ p["w4"] + p["b4"]


# ----------------------------------------------------------------------------
if __name__ == "__main__":
    key = jax.random.PRNGKey(0)
    k_x, k_p, k_bn = jax.random.split(key, 3)

    B = 8
    x = jax.random.normal(k_x, (B, INPUT_SIZE), dtype=jnp.float32)

    # 1) Torch-faithful init (BN stats are defaults).
    raw_params = init_torch_params(k_p)
    out = jax.block_until_ready(neural_network_forward(x, pack_kernel_params(raw_params)))
    assert out.shape == (B, OUT)
    ref_k = reference_forward_kernel_math(x, raw_params)
    assert jnp.allclose(out, ref_k, atol=2e-3, rtol=2e-3), float(jnp.max(jnp.abs(out - ref_k)))
    ref_f = reference_forward_f32(x, raw_params)
    assert jnp.allclose(out, ref_f, atol=1e-1, rtol=1e-1), float(jnp.max(jnp.abs(out - ref_f)))

    # 2) Non-trivial BN stats / biases to exercise the scale/shift folding.
    stress_params = randomize_bn_and_bias(raw_params, k_bn)
    out2 = jax.block_until_ready(neural_network_forward(x, pack_kernel_params(stress_params)))
    ref_k2 = reference_forward_kernel_math(x, stress_params)
    assert jnp.allclose(out2, ref_k2, atol=2e-3, rtol=2e-3), float(jnp.max(jnp.abs(out2 - ref_k2)))
    ref_f2 = reference_forward_f32(x, stress_params)
    assert jnp.allclose(out2, ref_f2, atol=1e-1, rtol=1e-1), float(jnp.max(jnp.abs(out2 - ref_f2)))

    print("KERNEL_OK")
</pallas_src>

<mosaic_0001>
module attributes {stable_mosaic.version = 11 : i64} {
  func.func @mlp_kernel(%arg0: i32, %arg1: memref<128x32xbf16, #tpu.memory_space<vmem>>, %arg2: memref<288x128xbf16, #tpu.memory_space<vmem>>, %arg3: memref<8x128xf32, #tpu.memory_space<vmem>>, %arg4: memref<128x1xf32, #tpu.memory_space<vmem>>) attributes {dimension_semantics = [#tpu.dimension_semantics<parallel>], iteration_bounds = array<i64: 1>, scalar_prefetch = 0 : i64, scratch_operands = 0 : i64, tpu.core_type = #tpu.core_type<tc>, window_params = [{transform_indices = @transform_0, window_bounds = array<i64: 128, 32>}, {pipeline_mode = #tpu.pipeline_mode<synchronous>, transform_indices = @transform_1, window_bounds = array<i64: 288, 128>}, {pipeline_mode = #tpu.pipeline_mode<synchronous>, transform_indices = @transform_2, window_bounds = array<i64: 8, 128>}, {transform_indices = @transform_3, window_bounds = array<i64: 128, 1>}]} {
    %c0 = arith.constant 0 : index
    %c0_0 = arith.constant 0 : index
    %0 = vector.load %arg1[%c0, %c0_0] : memref<128x32xbf16, #tpu.memory_space<vmem>>, vector<128x32xbf16>
    %c0_1 = arith.constant 0 : index
    %c0_2 = arith.constant 0 : index
    %1 = vector.load %arg2[%c0_1, %c0_2] : memref<288x128xbf16, #tpu.memory_space<vmem>>, vector<32x128xbf16>
    %cst = arith.constant dense<0.000000e+00> : vector<128x128xf32>
    %2 = tpu.matmul %0, %1, %cst {dimension_numbers = #tpu.dot_dimension_numbers<[1], [0], [0], [1], [0, 0, 1, 1], [], []>} : vector<128x32xbf16>, vector<32x128xbf16>, vector<128x128xf32> -> vector<128x128xf32>
    %c0_3 = arith.constant 0 : index
    %c0_4 = arith.constant 0 : index
    %3 = vector.load %arg3[%c0_3, %c0_4] : memref<8x128xf32, #tpu.memory_space<vmem>>, vector<1x128xf32>
    %4 = vector.broadcast %3 : vector<1x128xf32> to vector<128x128xf32>
    %5 = arith.addf %2, %4 : vector<128x128xf32>
    %cst_5 = arith.constant 0.000000e+00 : f32
    %6 = vector.broadcast %cst_5 : f32 to vector<128x128xf32>
    %7 = arith.maximumf %5, %6 : vector<128x128xf32>
    %8 = arith.truncf %7 : vector<128x128xf32> to vector<128x128xbf16>
    %c32 = arith.constant 32 : index
    %c0_6 = arith.constant 0 : index
    %9 = vector.load %arg2[%c32, %c0_6] : memref<288x128xbf16, #tpu.memory_space<vmem>>, vector<128x128xbf16>
    %cst_7 = arith.constant dense<0.000000e+00> : vector<128x128xf32>
    %10 = tpu.matmul %8, %9, %cst_7 {dimension_numbers = #tpu.dot_dimension_numbers<[1], [0], [0], [1], [0, 0, 1, 1], [], []>} : vector<128x128xbf16>, vector<128x128xbf16>, vector<128x128xf32> -> vector<128x128xf32>
    %c1 = arith.constant 1 : index
    %c0_8 = arith.constant 0 : index
    %11 = vector.load %arg3[%c1, %c0_8] : memref<8x128xf32, #tpu.memory_space<vmem>>, vector<1x128xf32>
    %12 = vector.broadcast %11 : vector<1x128xf32> to vector<128x128xf32>
    %13 = arith.addf %10, %12 : vector<128x128xf32>
    %cst_9 = arith.constant 0.000000e+00 : f32
    %14 = vector.broadcast %cst_9 : f32 to vector<128x128xf32>
    %15 = arith.maximumf %13, %14 : vector<128x128xf32>
    %16 = arith.addf %15, %7 : vector<128x128xf32>
    %17 = arith.truncf %16 : vector<128x128xf32> to vector<128x128xbf16>
    %c160 = arith.constant 160 : index
    %c0_10 = arith.constant 0 : index
    %18 = vector.load %arg2[%c160, %c0_10] : memref<288x128xbf16, #tpu.memory_space<vmem>>, vector<128x128xbf16>
    %cst_11 = arith.constant dense<0.000000e+00> : vector<128x128xf32>
    %19 = tpu.matmul %17, %18, %cst_11 {dimension_numbers = #tpu.dot_dimension_numbers<[1], [0], [0], [1], [0, 0, 1, 1], [], []>} : vector<128x128xbf16>, vector<128x128xbf16>, vector<128x128xf32> -> vector<128x128xf32>
    %c2 = arith.constant 2 : index
    %c0_12 = arith.constant 0 : index
    %20 = vector.load %arg3[%c2, %c0_12] : memref<8x128xf32, #tpu.memory_space<vmem>>, vector<1x128xf32>
    %21 = vector.broadcast %20 : vector<1x128xf32> to vector<128x128xf32>
    %22 = arith.addf %19, %21 : vector<128x128xf32>
    %cst_13 = arith.constant 0.000000e+00 : f32
    %23 = vector.broadcast %cst_13 : f32 to vector<128x128xf32>
    %24 = arith.maximumf %22, %23 : vector<128x128xf32>
    %c3 = arith.constant 3 : index
    %c0_14 = arith.constant 0 : index
    %25 = vector.load %arg3[%c3, %c0_14] : memref<8x128xf32, #tpu.memory_space<vmem>>, vector<1x128xf32>
    %26 = vector.broadcast %25 : vector<1x128xf32> to vector<128x128xf32>
    %27 = arith.mulf %24, %26 : vector<128x128xf32>
    %cst_15 = arith.constant dense<0.000000e+00> : vector<128xf32>
    %28 = vector.multi_reduction <add>, %27, %cst_15 [1] : vector<128x128xf32> to vector<128xf32>
    %29 = vector.shape_cast %28 : vector<128xf32> to vector<128x1xf32>
    %c4 = arith.constant 4 : index
    %c0_16 = arith.constant 0 : index
    %30 = vector.load %arg3[%c4, %c0_16] : memref<8x128xf32, #tpu.memory_space<vmem>>, vector<1x1xf32>
    %31 = vector.broadcast %30 : vector<1x1xf32> to vector<128x1xf32>
    %32 = arith.addf %29, %31 : vector<128x1xf32>
    %c0_17 = arith.constant 0 : index
    %c0_18 = arith.constant 0 : index
    %33 = vector.load %arg4[%c0_17, %c0_18] : memref<128x1xf32, #tpu.memory_space<vmem>>, vector<128x1xf32>
    tpu.vector_store %arg4[%c0_17, %c0_18], %32 {strides = array<i32>} : memref<128x1xf32, #tpu.memory_space<vmem>>, vector<128x1xf32>,
    return
  }
  func.func @transform_0(%arg0: i32) -> (i32, i32) {
    %c0_i32 = arith.constant 0 : i32
    %c0_i32_0 = arith.constant 0 : i32
    return %arg0, %c0_i32 : i32, i32
  }
  func.func @transform_1(%arg0: i32) -> (i32, i32) {
    %c0_i32 = arith.constant 0 : i32
    %c0_i32_0 = arith.constant 0 : i32
    %c0_i32_1 = arith.constant 0 : i32
    return %c0_i32, %c0_i32_0 : i32, i32
  }
  func.func @transform_2(%arg0: i32) -> (i32, i32) {
    %c0_i32 = arith.constant 0 : i32
    %c0_i32_0 = arith.constant 0 : i32
    %c0_i32_1 = arith.constant 0 : i32
    return %c0_i32, %c0_i32_0 : i32, i32
  }
  func.func @transform_3(%arg0: i32) -> (i32, i32) {
    %c0_i32 = arith.constant 0 : i32
    %c0_i32_0 = arith.constant 0 : i32
    return %arg0, %c0_i32 : i32, i32
  }
}

</mosaic_0001>

<llo_original>
// kernel: tpu_custom_call.1
$region0: #{tpu_custom_call.1}
  #allocation0 [shape = 'u32[]', space=smem, size = 0x4, offset = 0x4, fixed_abs, tag = 'smem constant byte address 0x4 - core index']
  #allocation1 [shape = 'u32[144,128]{1,0:T(1,128)}', space=vmem, size = 0x12000, scoped, tag = 'internal scratch']
  %s0 = inlined_call_operand.vmem [shape: bf16[128,32], index: 0, kind: input, shape index: {}]
  %s1 = inlined_call_operand.hbm [shape: bf16[288,128], index: 1, kind: input, shape index: {}]
  %s2 = inlined_call_operand.vmem [shape: f32[8,128], index: 2, kind: input, shape index: {}]
  %s3 = inlined_call_operand.vmem [shape: f32[128,1], index: 3, kind: output, shape index: {}]
  %s4 = sld [smem:[#allocation0]]
  $region26: #{tpu_custom_call.1} parent=0
    _
  %s6 = ssub.s32 1, %s4
  %s7 = scalar_select 0, %s6, %s4
  $region1: #{tpu_custom_call.1} parent=0
    #allocation2 [shape = 'u8[73728]{0}', space=vmem, size = 0x12000, scoped, tag = 'input window, operand 1, single buffered']
    #allocation3 [shape = 's32[1]{0}', space=sflag, size = 0x4, scoped, tag = 'scoped memory for tpu_custom_call.1']
    %8 = vsyncpa [#allocation3], 0
    // Predicated region
    $region2: #{tpu_custom_call.1} parent=1 // pred_check
      _
    $region3: #{tpu_custom_call.1} parent=1 // pred_check_branch
      %10 = sbr.rel (0) target = $region5
    $region4: #{tpu_custom_call.1} parent=1 // pred_region
      _
    $region5: #{tpu_custom_call.1} parent=1 // pred_fallthru
      _
    // Predicated region
    $region6: #{tpu_custom_call.1} parent=1 // pred_check
      _
    $region7: #{tpu_custom_call.1} parent=1 // pred_check_branch
      %12 = sbr.rel (0) target = $region9
    $region8: #{tpu_custom_call.1} parent=1 // pred_region
      %s14 = ssub.s32 2304, 2304
      %15 = vsyncadd [#allocation3], %s14
      %s16 = sshll.u32 [#allocation2], 4
      %s17 = int_to_ptr.vmem [resolvable:$true] %s16
      %22 = dma.hbm_to_vmem [thread:$0]  %s1, 2304, %s17, [#allocation3], 64, 64, 4
    $region9: #{tpu_custom_call.1} parent=1 // pred_fallthru
      _
    // Predicated region
    $region10: #{tpu_custom_call.1} parent=1 // pred_check
      _
    $region11: #{tpu_custom_call.1} parent=1 // pred_check_branch
      %24 = sbr.rel (0) target = $region13
    $region12: #{tpu_custom_call.1} parent=1 // pred_region
      _
    $region13: #{tpu_custom_call.1} parent=1 // pred_fallthru
      _
    // Predicated region
    $region14: #{tpu_custom_call.1} parent=1 // pred_check
      _
    $region15: #{tpu_custom_call.1} parent=1 // pred_check_branch
      %26 = sbr.rel (0) target = $region17
    $region16: #{tpu_custom_call.1} parent=1 // pred_region
      %27 = dma.done [#allocation3], 2304
    $region17: #{tpu_custom_call.1} parent=1 // pred_fallthru
      _
    %v29 = vld [vmem:[%s0] sm:$0xf]
    %v30 = vld [vmem:[%s0 + $0x4] sm:$0xf]
    %v31 = vld [vmem:[%s0 + $0x8] sm:$0xf]
    %v32 = vld [vmem:[%s0 + $0xc] sm:$0xf]
    %v33 = vld [vmem:[%s0 + $0x10] sm:$0xf]
    %v34 = vld [vmem:[%s0 + $0x14] sm:$0xf]
    %v35 = vld [vmem:[%s0 + $0x18] sm:$0xf]
    %v36 = vld [vmem:[%s0 + $0x1c] sm:$0xf]
    %v37 = vld [vmem:[%s0 + $0x20] sm:$0xf]
    %v38 = vld [vmem:[%s0 + $0x24] sm:$0xf]
    %v39 = vld [vmem:[%s0 + $0x28] sm:$0xf]
    %v40 = vld [vmem:[%s0 + $0x2c] sm:$0xf]
    %v41 = vld [vmem:[%s0 + $0x30] sm:$0xf]
    %v42 = vld [vmem:[%s0 + $0x34] sm:$0xf]
    %v43 = vld [vmem:[%s0 + $0x38] sm:$0xf]
    %v44 = vld [vmem:[%s0 + $0x3c] sm:$0xf]
    %v45 = vld [vmem:[#allocation2] sm:$0xf]
    %v46 = vld [vmem:[#allocation2 + $0x4] sm:$0xf]
    %v47 = vld [vmem:[#allocation2 + $0x8] sm:$0xf]
    %v48 = vld [vmem:[#allocation2 + $0xc] sm:$0xf]
    %v49 = vld [vmem:[%s2] sm:$0x1]
    %v50 = vlaneseq
    %v51 = vshrl.u32 %v50, 7
    %v52 = vsub.s32 0, %v51
    %v53 = vrot.slane %v49, %v52
    %v70 = vunpack.c.l.b16 %v29
    %v71 = vunpack.c.l.b16 %v30
    %v72 = vunpack.c.l.b16 %v31
    %v73 = vunpack.c.l.b16 %v32
    %v74 = vunpack.c.l.b16 %v33
    %v75 = vunpack.c.l.b16 %v34
    %v76 = vunpack.c.l.b16 %v35
    %v77 = vunpack.c.l.b16 %v36
    %v78 = vunpack.c.l.b16 %v37
    %v79 = vunpack.c.l.b16 %v38
    %v80 = vunpack.c.l.b16 %v39
    %v81 = vunpack.c.l.b16 %v40
    %v82 = vunpack.c.l.b16 %v41
    %v83 = vunpack.c.l.b16 %v42
    %v84 = vunpack.c.l.b16 %v43
    %v85 = vunpack.c.l.b16 %v44
    %v86 = vpack.c.b16 %v71, %v70
    %v87 = vpack.c.b16 %v73, %v72
    %v88 = vpack.c.b16 %v75, %v74
    %v89 = vpack.c.b16 %v77, %v76
    %v90 = vpack.c.b16 %v79, %v78
    %v91 = vpack.c.b16 %v81, %v80
    %v92 = vpack.c.b16 %v83, %v82
    %v93 = vpack.c.b16 %v85, %v84
    %v98 = vunpack.c.l.b16 %v45
    %v99 = vunpack.c.l.b16 %v46
    %v100 = vunpack.c.l.b16 %v47
    %v101 = vunpack.c.l.b16 %v48
    %v102 = vpack.c.b16 %v99, %v98
    %v103 = vpack.c.b16 %v101, %v100
    %vm106 = vcmask 261120
    %v108 = vsel %vm106, %v86, 0
    %v111 = vsel %vm106, %v87, 0
    %v114 = vsel %vm106, %v88, 0
    %v117 = vsel %vm106, %v89, 0
    %v120 = vsel %vm106, %v90, 0
    %v123 = vsel %vm106, %v91, 0
    %v126 = vsel %vm106, %v92, 0
    %v129 = vsel %vm106, %v93, 0
    %131 = vmatprep.subr.bf16.mxu0 0
    %132 = vmatpush1.bf16.msra.mxu0 %v102
    %133 = vmatprep.subr.bf16.mxu0 0
    %134 = vmatpush1.bf16.msra.mxu0 %v103
    %135 = vmatprep.subr.bf16.mxu0 0
    %136 = vmatpush1.bf16.msra.mxu0 0
    %137 = vmatprep.subr.bf16.mxu0 0
    %138 = vmatpush1.bf16.msra.mxu0 0
    %139 = vmatprep.subr.bf16.mxu0 0
    %140 = vmatpush1.bf16.msra.mxu0 0
    %141 = vmatprep.subr.bf16.mxu0 0
    %142 = vmatpush1.bf16.msra.mxu0 0
    %143 = vmatprep.subr.bf16.mxu0 0
    %144 = vmatpush1.bf16.msra.mxu0 0
    %145 = vmatprep.subr.bf16.mxu0 0
    %146 = vmatpush1.bf16.msra.mxu0 0
    %147 = vmatprep.subr.bf16.mxu0 0
    %148 = vmatpush1.bf16.msra.mxu0 0
    %149 = vmatprep.subr.bf16.mxu0 0
    %150 = vmatpush1.bf16.msra.mxu0 0
    %151 = vmatprep.subr.bf16.mxu0 0
    %152 = vmatpush1.bf16.msra.mxu0 0
    %153 = vmatprep.subr.bf16.mxu0 0
    %154 = vmatpush1.bf16.msra.mxu0 0
    %155 = vmatprep.subr.bf16.mxu0 0
    %156 = vmatpush1.bf16.msra.mxu0 0
    %157 = vmatprep.subr.bf16.mxu0 0
    %158 = vmatpush1.bf16.msra.mxu0 0
    %159 = vmatprep.subr.bf16.mxu0 0
    %160 = vmatpush1.bf16.msra.mxu0 0
    %161 = vmatprep.subr.bf16.mxu0 0
    %162 = vmatpush1.bf16.msra.mxu0 0
    %163 = vmatprep.mubr.bf16.mxu0 0
    %164 = vmatmul.mubr.bf16.gmra.mrb[0].mxu0 %v108
    %v165 = vpop.f32.mrb[0].mxu0
    %v166 = vadd.f32 %v53, %v165
    %v167 = vpop.f32.mrb[0].mxu0
    %v168 = vpop.f32.mrb[0].mxu0
    %v169 = vadd.f32 %v53, %v168
    %v170 = vpop.f32.mrb[0].mxu0
    %171 = vmatprep.mubr.bf16.mxu0 0
    %172 = vmatmul.mubr.bf16.gmra.mrb[0].mxu0 %v111
    %v173 = vpop.f32.mrb[0].mxu0
    %v174 = vadd.f32 %v53, %v173
    %v175 = vpop.f32.mrb[0].mxu0
    %v176 = vpop.f32.mrb[0].mxu0
    %v177 = vadd.f32 %v53, %v176
    %v178 = vpop.f32.mrb[0].mxu0
    %179 = vmatprep.mubr.bf16.mxu0 0
    %180 = vmatmul.mubr.bf16.gmra.mrb[0].mxu0 %v114
    %v181 = vpop.f32.mrb[0].mxu0
    %v182 = vadd.f32 %v53, %v181
    %v183 = vpop.f32.mrb[0].mxu0
    %v184 = vpop.f32.mrb[0].mxu0
    %v185 = vadd.f32 %v53, %v184
    %v186 = vpop.f32.mrb[0].mxu0
    %187 = vmatprep.mubr.bf16.mxu0 0
    %188 = vmatmul.mubr.bf16.gmra.mrb[0].mxu0 %v117
    %v189 = vpop.f32.mrb[0].mxu0
    %v190 = vadd.f32 %v53, %v189
    %v191 = vpop.f32.mrb[0].mxu0
    %v192 = vpop.f32.mrb[0].mxu0
    %v193 = vadd.f32 %v53, %v192
    %v194 = vpop.f32.mrb[0].mxu0
    %195 = vmatprep.mubr.bf16.mxu0 0
    %196 = vmatmul.mubr.bf16.gmra.mrb[0].mxu0 %v120
    %v197 = vpop.f32.mrb[0].mxu0
    %v198 = vadd.f32 %v53, %v197
    %v199 = vpop.f32.mrb[0].mxu0
    %v200 = vpop.f32.mrb[0].mxu0
    %v201 = vadd.f32 %v53, %v200
    %v202 = vpop.f32.mrb[0].mxu0
    %203 = vmatprep.mubr.bf16.mxu0 0
    %204 = vmatmul.mubr.bf16.gmra.mrb[0].mxu0 %v123
    %v205 = vpop.f32.mrb[0].mxu0
    %v206 = vadd.f32 %v53, %v205
    %v207 = vpop.f32.mrb[0].mxu0
    %v208 = vpop.f32.mrb[0].mxu0
    %v209 = vadd.f32 %v53, %v208
    %v210 = vpop.f32.mrb[0].mxu0
    %211 = vmatprep.mubr.bf16.mxu0 0
    %212 = vmatmul.mubr.bf16.gmra.mrb[0].mxu0 %v126
    %v213 = vpop.f32.mrb[0].mxu0
    %v214 = vadd.f32 %v53, %v213
    %v215 = vpop.f32.mrb[0].mxu0
    %v216 = vpop.f32.mrb[0].mxu0
    %v217 = vadd.f32 %v53, %v216
    %v218 = vpop.f32.mrb[0].mxu0
    %219 = vmatprep.mubr.bf16.mxu0 0
    %220 = vmatmul.mubr.bf16.gmra.mrb[0].mxu0 %v129
    %v221 = vpop.f32.mrb[0].mxu0
    %v222 = vadd.f32 %v53, %v221
    %v223 = vpop.f32.mrb[0].mxu0
    %v224 = vpop.f32.mrb[0].mxu0
    %v225 = vadd.f32 %v53, %v224
    %v226 = vpop.f32.mrb[0].mxu0
    %227 = vdwg.mxu0
    %v228 = vmax.f32 %v166, 0.0
    %v229 = vmax.f32 %v169, 0.0
    %v230 = vmax.f32 %v174, 0.0
    %v231 = vmax.f32 %v177, 0.0
    %v232 = vmax.f32 %v182, 0.0
    %v233 = vmax.f32 %v185, 0.0
    %v234 = vmax.f32 %v190, 0.0
    %v235 = vmax.f32 %v193, 0.0
    %v236 = vmax.f32 %v198, 0.0
    %v237 = vmax.f32 %v201, 0.0
    %v238 = vmax.f32 %v206, 0.0
    %v239 = vmax.f32 %v209, 0.0
    %v240 = vmax.f32 %v214, 0.0
    %v241 = vmax.f32 %v217, 0.0
    %v242 = vmax.f32 %v222, 0.0
    %v243 = vmax.f32 %v225, 0.0
    %v244 = vpack.c.bf16 %v229, %v228
    %v245 = vpack.c.bf16 %v231, %v230
    %v246 = vpack.c.bf16 %v233, %v232
    %v247 = vpack.c.bf16 %v235, %v234
    %v248 = vpack.c.bf16 %v237, %v236
    %v249 = vpack.c.bf16 %v239, %v238
    %v250 = vpack.c.bf16 %v241, %v240
    %v251 = vpack.c.bf16 %v243, %v242
    %v252 = vld [vmem:[#allocation2 + $0x10] sm:$0xf]
    %v253 = vld [vmem:[#allocation2 + $0x14] sm:$0xf]
    %v254 = vld [vmem:[#allocation2 + $0x18] sm:$0xf]
    %v255 = vld [vmem:[#allocation2 + $0x1c] sm:$0xf]
    %v256 = vld [vmem:[#allocation2 + $0x20] sm:$0xf]
    %v257 = vld [vmem:[#allocation2 + $0x24] sm:$0xf]
    %v258 = vld [vmem:[#allocation2 + $0x28] sm:$0xf]
    %v259 = vld [vmem:[#allocation2 + $0x2c] sm:$0xf]
    %v260 = vld [vmem:[#allocation2 + $0x30] sm:$0xf]
    %v261 = vld [vmem:[#allocation2 + $0x34] sm:$0xf]
    %v262 = vld [vmem:[#allocation2 + $0x38] sm:$0xf]
    %v263 = vld [vmem:[#allocation2 + $0x3c] sm:$0xf]
    %v264 = vld [vmem:[#allocation2 + $0x40] sm:$0xf]
    %v265 = vld [vmem:[#allocation2 + $0x44] sm:$0xf]
    %v266 = vld [vmem:[#allocation2 + $0x48] sm:$0xf]
    %v267 = vld [vmem:[#allocation2 + $0x4c] sm:$0xf]
    %v268 = vld [vmem:[%s2 + $0x1] sm:$0x1]
    %v269 = vlaneseq
    %v270 = vshrl.u32 %v269, 7
    %v271 = vsub.s32 0, %v270
    %v272 = vrot.slane %v268, %v271
    %v289 = vunpack.c.l.b16 %v252
    %v290 = vunpack.c.l.b16 %v253
    %v291 = vunpack.c.l.b16 %v254
    %v292 = vunpack.c.l.b16 %v255
    %v293 = vunpack.c.l.b16 %v256
    %v294 = vunpack.c.l.b16 %v257
    %v295 = vunpack.c.l.b16 %v258
    %v296 = vunpack.c.l.b16 %v259
    %v297 = vunpack.c.l.b16 %v260
    %v298 = vunpack.c.l.b16 %v261
    %v299 = vunpack.c.l.b16 %v262
    %v300 = vunpack.c.l.b16 %v263
    %v301 = vunpack.c.l.b16 %v264
    %v302 = vunpack.c.l.b16 %v265
    %v303 = vunpack.c.l.b16 %v266
    %v304 = vunpack.c.l.b16 %v267
    %v305 = vpack.c.b16 %v290, %v289
    %v306 = vpack.c.b16 %v292, %v291
    %v307 = vpack.c.b16 %v294, %v293
    %v308 = vpack.c.b16 %v296, %v295
    %v309 = vpack.c.b16 %v298, %v297
    %v310 = vpack.c.b16 %v300, %v299
    %v311 = vpack.c.b16 %v302, %v301
    %v312 = vpack.c.b16 %v304, %v303
    %321 = vmatprep.subr.bf16.mxu0 0
    %322 = vmatpush1.bf16.msra.mxu0 %v305
    %323 = vmatprep.subr.bf16.mxu0 0
    %324 = vmatpush1.bf16.msra.mxu0 %v306
    %325 = vmatprep.subr.bf16.mxu0 0
    %326 = vmatpush1.bf16.msra.mxu0 %v307
    %327 = vmatprep.subr.bf16.mxu0 0
    %328 = vmatpush1.bf16.msra.mxu0 %v308
    %329 = vmatprep.subr.bf16.mxu0 0
    %330 = vmatpush1.bf16.msra.mxu0 %v309
    %331 = vmatprep.subr.bf16.mxu0 0
    %332 = vmatpush1.bf16.msra.mxu0 %v310
    %333 = vmatprep.subr.bf16.mxu0 0
    %334 = vmatpush1.bf16.msra.mxu0 %v311
    %335 = vmatprep.subr.bf16.mxu0 0
    %336 = vmatpush1.bf16.msra.mxu0 %v312
    %337 = vmatprep.subr.bf16.mxu0 0
    %338 = vmatpush1.bf16.msra.mxu0 0
    %339 = vmatprep.subr.bf16.mxu0 0
    %340 = vmatpush1.bf16.msra.mxu0 0
    %341 = vmatprep.subr.bf16.mxu0 0
    %342 = vmatpush1.bf16.msra.mxu0 0
    %343 = vmatprep.subr.bf16.mxu0 0
    %344 = vmatpush1.bf16.msra.mxu0 0
    %345 = vmatprep.subr.bf16.mxu0 0
    %346 = vmatpush1.bf16.msra.mxu0 0
    %347 = vmatprep.subr.bf16.mxu0 0
    %348 = vmatpush1.bf16.msra.mxu0 0
    %349 = vmatprep.subr.bf16.mxu0 0
    %350 = vmatpush1.bf16.msra.mxu0 0
    %351 = vmatprep.subr.bf16.mxu0 0
    %352 = vmatpush1.bf16.msra.mxu0 0
    %353 = vmatprep.mubr.bf16.mxu0 0
    %354 = vmatmul.mubr.bf16.gmra.mrb[0].mxu0 %v244
    %v355 = vpop.f32.mrb[0].mxu0
    %v356 = vadd.f32 %v272, %v355
    %v357 = vpop.f32.mrb[0].mxu0
    %v358 = vpop.f32.mrb[0].mxu0
    %v359 = vadd.f32 %v272, %v358
    %v360 = vpop.f32.mrb[0].mxu0
    %361 = vmatprep.mubr.bf16.mxu0 0
    %362 = vmatmul.mubr.bf16.gmra.mrb[0].mxu0 %v245
    %v363 = vpop.f32.mrb[0].mxu0
    %v364 = vadd.f32 %v272, %v363
    %v365 = vpop.f32.mrb[0].mxu0
    %v366 = vpop.f32.mrb[0].mxu0
    %v367 = vadd.f32 %v272, %v366
    %v368 = vpop.f32.mrb[0].mxu0
    %369 = vmatprep.mubr.bf16.mxu0 0
    %370 = vmatmul.mubr.bf16.gmra.mrb[0].mxu0 %v246
    %v371 = vpop.f32.mrb[0].mxu0
    %v372 = vadd.f32 %v272, %v371
    %v373 = vpop.f32.mrb[0].mxu0
    %v374 = vpop.f32.mrb[0].mxu0
    %v375 = vadd.f32 %v272, %v374
    %v376 = vpop.f32.mrb[0].mxu0
    %377 = vmatprep.mubr.bf16.mxu0 0
    %378 = vmatmul.mubr.bf16.gmra.mrb[0].mxu0 %v247
    %v379 = vpop.f32.mrb[0].mxu0
    %v380 = vadd.f32 %v272, %v379
    %v381 = vpop.f32.mrb[0].mxu0
    %v382 = vpop.f32.mrb[0].mxu0
    %v383 = vadd.f32 %v272, %v382
    %v384 = vpop.f32.mrb[0].mxu0
    %385 = vmatprep.mubr.bf16.mxu0 0
    %386 = vmatmul.mubr.bf16.gmra.mrb[0].mxu0 %v248
    %v387 = vpop.f32.mrb[0].mxu0
    %v388 = vadd.f32 %v272, %v387
    %v389 = vpop.f32.mrb[0].mxu0
    %v390 = vpop.f32.mrb[0].mxu0
    %v391 = vadd.f32 %v272, %v390
    %v392 = vpop.f32.mrb[0].mxu0
    %393 = vmatprep.mubr.bf16.mxu0 0
    %394 = vmatmul.mubr.bf16.gmra.mrb[0].mxu0 %v249
    %v395 = vpop.f32.mrb[0].mxu0
    %v396 = vadd.f32 %v272, %v395
    %v397 = vpop.f32.mrb[0].mxu0
    %v398 = vpop.f32.mrb[0].mxu0
    %v399 = vadd.f32 %v272, %v398
    %v400 = vpop.f32.mrb[0].mxu0
    %401 = vmatprep.mubr.bf16.mxu0 0
    %402 = vmatmul.mubr.bf16.gmra.mrb[0].mxu0 %v250
    %v403 = vpop.f32.mrb[0].mxu0
    %v404 = vadd.f32 %v272, %v403
    %v405 = vpop.f32.mrb[0].mxu0
    %v406 = vpop.f32.mrb[0].mxu0
    %v407 = vadd.f32 %v272, %v406
    %v408 = vpop.f32.mrb[0].mxu0
    %409 = vmatprep.mubr.bf16.mxu0 0
    %410 = vmatmul.mubr.bf16.gmra.mrb[0].mxu0 %v251
    %v411 = vpop.f32.mrb[0].mxu0
    %v412 = vadd.f32 %v272, %v411
    %v413 = vpop.f32.mrb[0].mxu0
    %v414 = vpop.f32.mrb[0].mxu0
    %v415 = vadd.f32 %v272, %v414
    %v416 = vpop.f32.mrb[0].mxu0
    %417 = vdwg.mxu0
    %v418 = vmax.f32 %v356, 0.0
    %v419 = vmax.f32 %v359, 0.0
    %v420 = vmax.f32 %v364, 0.0
    %v421 = vmax.f32 %v367, 0.0
    %v422 = vmax.f32 %v372, 0.0
    %v423 = vmax.f32 %v375, 0.0
    %v424 = vmax.f32 %v380, 0.0
    %v425 = vmax.f32 %v383, 0.0
    %v426 = vmax.f32 %v388, 0.0
    %v427 = vmax.f32 %v391, 0.0
    %v428 = vmax.f32 %v396, 0.0
    %v429 = vmax.f32 %v399, 0.0
    %v430 = vmax.f32 %v404, 0.0
    %v431 = vmax.f32 %v407, 0.0
    %v432 = vmax.f32 %v412, 0.0
    %v433 = vmax.f32 %v415, 0.0
    %v434 = vadd.f32 %v418, %v228
    %v435 = vadd.f32 %v419, %v229
    %v436 = vadd.f32 %v420, %v230
    %v437 = vadd.f32 %v421, %v231
    %v438 = vadd.f32 %v422, %v232
    %v439 = vadd.f32 %v423, %v233
    %v440 = vadd.f32 %v424, %v234
    %v441 = vadd.f32 %v425, %v235
    %v442 = vadd.f32 %v426, %v236
    %v443 = vadd.f32 %v427, %v237
    %v444 = vadd.f32 %v428, %v238
    %v445 = vadd.f32 %v429, %v239
    %v446 = vadd.f32 %v430, %v240
    %v447 = vadd.f32 %v431, %v241
    %v448 = vadd.f32 %v432, %v242
    %v449 = vadd.f32 %v433, %v243
    %v450 = vpack.c.bf16 %v435, %v434
    %v451 = vpack.c.bf16 %v437, %v436
    %v452 = vpack.c.bf16 %v439, %v438
    %v453 = vpack.c.bf16 %v441, %v440
    %v454 = vpack.c.bf16 %v443, %v442
    %v455 = vpack.c.bf16 %v445, %v444
    %v456 = vpack.c.bf16 %v447, %v446
    %v457 = vpack.c.bf16 %v449, %v448
    %v458 = vld [vmem:[#allocation2 + $0x50] sm:$0xf]
    %v459 = vld [vmem:[#allocation2 + $0x54] sm:$0xf]
    %v460 = vld [vmem:[#allocation2 + $0x58] sm:$0xf]
    %v461 = vld [vmem:[#allocation2 + $0x5c] sm:$0xf]
    %v462 = vld [vmem:[#allocation2 + $0x60] sm:$0xf]
    %v463 = vld [vmem:[#allocation2 + $0x64] sm:$0xf]
    %v464 = vld [vmem:[#allocation2 + $0x68] sm:$0xf]
    %v465 = vld [vmem:[#allocation2 + $0x6c] sm:$0xf]
    %v466 = vld [vmem:[#allocation2 + $0x70] sm:$0xf]
    %v467 = vld [vmem:[#allocation2 + $0x74] sm:$0xf]
    %v468 = vld [vmem:[#allocation2 + $0x78] sm:$0xf]
    %v469 = vld [vmem:[#allocation2 + $0x7c] sm:$0xf]
    %v470 = vld [vmem:[#allocation2 + $0x80] sm:$0xf]
    %v471 = vld [vmem:[#allocation2 + $0x84] sm:$0xf]
    %v472 = vld [vmem:[#allocation2 + $0x88] sm:$0xf]
    %v473 = vld [vmem:[#allocation2 + $0x8c] sm:$0xf]
    %v474 = vld [vmem:[%s2 + $0x2] sm:$0x1]
    %v475 = vlaneseq
    %v476 = vshrl.u32 %v475, 7
    %v477 = vsub.s32 0, %v476
    %v478 = vrot.slane %v474, %v477
    %v495 = vunpack.c.l.b16 %v458
    %v496 = vunpack.c.l.b16 %v459
    %v497 = vunpack.c.l.b16 %v460
    %v498 = vunpack.c.l.b16 %v461
    %v499 = vunpack.c.l.b16 %v462
    %v500 = vunpack.c.l.b16 %v463
    %v501 = vunpack.c.l.b16 %v464
    %v502 = vunpack.c.l.b16 %v465
    %v503 = vunpack.c.l.b16 %v466
    %v504 = vunpack.c.l.b16 %v467
    %v505 = vunpack.c.l.b16 %v468
    %v506 = vunpack.c.l.b16 %v469
    %v507 = vunpack.c.l.b16 %v470
    %v508 = vunpack.c.l.b16 %v471
    %v509 = vunpack.c.l.b16 %v472
    %v510 = vunpack.c.l.b16 %v473
    %v511 = vpack.c.b16 %v496, %v495
    %v512 = vpack.c.b16 %v498, %v497
    %v513 = vpack.c.b16 %v500, %v499
    %v514 = vpack.c.b16 %v502, %v501
    %v515 = vpack.c.b16 %v504, %v503
    %v516 = vpack.c.b16 %v506, %v505
    %v517 = vpack.c.b16 %v508, %v507
    %v518 = vpack.c.b16 %v510, %v509
    %527 = vmatprep.subr.bf16.mxu0 0
    %528 = vmatpush1.bf16.msra.mxu0 %v511
    %529 = vmatprep.subr.bf16.mxu0 0
    %530 = vmatpush1.bf16.msra.mxu0 %v512
    %531 = vmatprep.subr.bf16.mxu0 0
    %532 = vmatpush1.bf16.msra.mxu0 %v513
    %533 = vmatprep.subr.bf16.mxu0 0
    %534 = vmatpush1.bf16.msra.mxu0 %v514
    %535 = vmatprep.subr.bf16.mxu0 0
    %536 = vmatpush1.bf16.msra.mxu0 %v515
    %537 = vmatprep.subr.bf16.mxu0 0
    %538 = vmatpush1.bf16.msra.mxu0 %v516
    %539 = vmatprep.subr.bf16.mxu0 0
    %540 = vmatpush1.bf16.msra.mxu0 %v517
    %541 = vmatprep.subr.bf16.mxu0 0
    %542 = vmatpush1.bf16.msra.mxu0 %v518
    %543 = vmatprep.subr.bf16.mxu0 0
    %544 = vmatpush1.bf16.msra.mxu0 0
    %545 = vmatprep.subr.bf16.mxu0 0
    %546 = vmatpush1.bf16.msra.mxu0 0
    %547 = vmatprep.subr.bf16.mxu0 0
    %548 = vmatpush1.bf16.msra.mxu0 0
    %549 = vmatprep.subr.bf16.mxu0 0
    %550 = vmatpush1.bf16.msra.mxu0 0
    %551 = vmatprep.subr.bf16.mxu0 0
    %552 = vmatpush1.bf16.msra.mxu0 0
    %553 = vmatprep.subr.bf16.mxu0 0
    %554 = vmatpush1.bf16.msra.mxu0 0
    %555 = vmatprep.subr.bf16.mxu0 0
    %556 = vmatpush1.bf16.msra.mxu0 0
    %557 = vmatprep.subr.bf16.mxu0 0
    %558 = vmatpush1.bf16.msra.mxu0 0
    %559 = vmatprep.mubr.bf16.mxu0 0
    %560 = vmatmul.mubr.bf16.gmra.mrb[0].mxu0 %v450
    %v561 = vpop.f32.mrb[0].mxu0
    %v562 = vadd.f32 %v478, %v561
    %v563 = vpop.f32.mrb[0].mxu0
    %v564 = vpop.f32.mrb[0].mxu0
    %v565 = vadd.f32 %v478, %v564
    %v566 = vpop.f32.mrb[0].mxu0
    %567 = vmatprep.mubr.bf16.mxu0 0
    %568 = vmatmul.mubr.bf16.gmra.mrb[0].mxu0 %v451
    %v569 = vpop.f32.mrb[0].mxu0
    %v570 = vadd.f32 %v478, %v569
    %v571 = vpop.f32.mrb[0].mxu0
    %v572 = vpop.f32.mrb[0].mxu0
    %v573 = vadd.f32 %v478, %v572
    %v574 = vpop.f32.mrb[0].mxu0
    %575 = vmatprep.mubr.bf16.mxu0 0
    %576 = vmatmul.mubr.bf16.gmra.mrb[0].mxu0 %v452
    %v577 = vpop.f32.mrb[0].mxu0
    %v578 = vadd.f32 %v478, %v577
    %v579 = vpop.f32.mrb[0].mxu0
    %v580 = vpop.f32.mrb[0].mxu0
    %v581 = vadd.f32 %v478, %v580
    %v582 = vpop.f32.mrb[0].mxu0
    %583 = vmatprep.mubr.bf16.mxu0 0
    %584 = vmatmul.mubr.bf16.gmra.mrb[0].mxu0 %v453
    %v585 = vpop.f32.mrb[0].mxu0
    %v586 = vadd.f32 %v478, %v585
    %v587 = vpop.f32.mrb[0].mxu0
    %v588 = vpop.f32.mrb[0].mxu0
    %v589 = vadd.f32 %v478, %v588
    %v590 = vpop.f32.mrb[0].mxu0
    %591 = vmatprep.mubr.bf16.mxu0 0
    %592 = vmatmul.mubr.bf16.gmra.mrb[0].mxu0 %v454
    %v593 = vpop.f32.mrb[0].mxu0
    %v594 = vadd.f32 %v478, %v593
    %v595 = vpop.f32.mrb[0].mxu0
    %v596 = vpop.f32.mrb[0].mxu0
    %v597 = vadd.f32 %v478, %v596
    %v598 = vpop.f32.mrb[0].mxu0
    %599 = vmatprep.mubr.bf16.mxu0 0
    %600 = vmatmul.mubr.bf16.gmra.mrb[0].mxu0 %v455
    %v601 = vpop.f32.mrb[0].mxu0
    %v602 = vadd.f32 %v478, %v601
    %v603 = vpop.f32.mrb[0].mxu0
    %v604 = vpop.f32.mrb[0].mxu0
    %v605 = vadd.f32 %v478, %v604
    %v606 = vpop.f32.mrb[0].mxu0
    %607 = vmatprep.mubr.bf16.mxu0 0
    %608 = vmatmul.mubr.bf16.gmra.mrb[0].mxu0 %v456
    %v609 = vpop.f32.mrb[0].mxu0
    %v610 = vadd.f32 %v478, %v609
    %v611 = vpop.f32.mrb[0].mxu0
    %v612 = vpop.f32.mrb[0].mxu0
    %v613 = vadd.f32 %v478, %v612
    %v614 = vpop.f32.mrb[0].mxu0
    %615 = vmatprep.mubr.bf16.mxu0 0
    %616 = vmatmul.mubr.bf16.gmra.mrb[0].mxu0 %v457
    %v617 = vpop.f32.mrb[0].mxu0
    %v618 = vadd.f32 %v478, %v617
    %v619 = vpop.f32.mrb[0].mxu0
    %v620 = vpop.f32.mrb[0].mxu0
    %v621 = vadd.f32 %v478, %v620
    %v622 = vpop.f32.mrb[0].mxu0
    %623 = vdwg.mxu0
    %v624 = vmax.f32 %v562, 0.0
    %v625 = vmax.f32 %v565, 0.0
    %v626 = vmax.f32 %v570, 0.0
    %v627 = vmax.f32 %v573, 0.0
    %v628 = vmax.f32 %v578, 0.0
    %v629 = vmax.f32 %v581, 0.0
    %v630 = vmax.f32 %v586, 0.0
    %v631 = vmax.f32 %v589, 0.0
    %v632 = vmax.f32 %v594, 0.0
    %v633 = vmax.f32 %v597, 0.0
    %v634 = vmax.f32 %v602, 0.0
    %v635 = vmax.f32 %v605, 0.0
    %v636 = vmax.f32 %v610, 0.0
    %v637 = vmax.f32 %v613, 0.0
    %v638 = vmax.f32 %v618, 0.0
    %v639 = vmax.f32 %v621, 0.0
    %v640 = vld [vmem:[%s2 + $0x3] sm:$0x1]
    %v641 = vlaneseq
    %v642 = vshrl.u32 %v641, 7
    %v643 = vsub.s32 0, %v642
    %v644 = vrot.slane %v640, %v643
    %v645 = vmul.f32 %v624, %v644
    %v646 = vmul.f32 %v625, %v644
    %v647 = vmul.f32 %v626, %v644
    %v648 = vmul.f32 %v627, %v644
    %v649 = vmul.f32 %v628, %v644
    %v650 = vmul.f32 %v629, %v644
    %v651 = vmul.f32 %v630, %v644
    %v652 = vmul.f32 %v631, %v644
    %v653 = vmul.f32 %v632, %v644
    %v654 = vmul.f32 %v633, %v644
    %v655 = vmul.f32 %v634, %v644
    %v656 = vmul.f32 %v635, %v644
    %v657 = vmul.f32 %v636, %v644
    %v658 = vmul.f32 %v637, %v644
    %v659 = vmul.f32 %v638, %v644
    %v660 = vmul.f32 %v639, %v644
    %661 = vadd.xlane.f32.xlu0 %v645
    %v662 = vpop.xlane.xlu0 %661
    %663 = vadd.xlane.f32.xlu0 %v646
    %v664 = vpop.xlane.xlu0 %663
    %665 = vadd.xlane.f32.xlu0 %v647
    %v666 = vpop.xlane.xlu0 %665
    %667 = vadd.xlane.f32.xlu0 %v648
    %v668 = vpop.xlane.xlu0 %667
    %669 = vadd.xlane.f32.xlu0 %v649
    %v670 = vpop.xlane.xlu0 %669
    %671 = vadd.xlane.f32.xlu0 %v650
    %v672 = vpop.xlane.xlu0 %671
    %673 = vadd.xlane.f32.xlu0 %v651
    %v674 = vpop.xlane.xlu0 %673
    %675 = vadd.xlane.f32.xlu0 %v652
    %v676 = vpop.xlane.xlu0 %675
    %677 = vadd.xlane.f32.xlu0 %v653
    %v678 = vpop.xlane.xlu0 %677
    %679 = vadd.xlane.f32.xlu0 %v654
    %v680 = vpop.xlane.xlu0 %679
    %681 = vadd.xlane.f32.xlu0 %v655
    %v682 = vpop.xlane.xlu0 %681
    %683 = vadd.xlane.f32.xlu0 %v656
    %v684 = vpop.xlane.xlu0 %683
    %685 = vadd.xlane.f32.xlu0 %v657
    %v686 = vpop.xlane.xlu0 %685
    %687 = vadd.xlane.f32.xlu0 %v658
    %v688 = vpop.xlane.xlu0 %687
    %689 = vadd.xlane.f32.xlu0 %v659
    %v690 = vpop.xlane.xlu0 %689
    %691 = vadd.xlane.f32.xlu0 %v660
    %v692 = vpop.xlane.xlu0 %691
    %v693 = vld [vmem:[%s2 + $0x4] sm:$0x1]
    %v694 = vlaneseq
    %v695 = vshrl.u32 %v694, 7
    %v696 = vsub.s32 0, %v695
    %v697 = vrot.slane %v693, %v696
    %v698 = vadd.f32 %v662, %v697
    %v699 = vadd.f32 %v664, %v697
    %v700 = vadd.f32 %v666, %v697
    %v701 = vadd.f32 %v668, %v697
    %v702 = vadd.f32 %v670, %v697
    %v703 = vadd.f32 %v672, %v697
    %v704 = vadd.f32 %v674, %v697
    %v705 = vadd.f32 %v676, %v697
    %v706 = vadd.f32 %v678, %v697
    %v707 = vadd.f32 %v680, %v697
    %v708 = vadd.f32 %v682, %v697
    %v709 = vadd.f32 %v684, %v697
    %v710 = vadd.f32 %v686, %v697
    %v711 = vadd.f32 %v688, %v697
    %v712 = vadd.f32 %v690, %v697
    %v713 = vadd.f32 %v692, %v697
    %vm714 = vcmask 7168
    %715 = vst.msk [vmem:[%s3] sm:$0xff] %vm714, %v698
    %716 = vst.msk [vmem:[%s3 + $0x8] sm:$0xff] %vm714, %v699
    %717 = vst.msk [vmem:[%s3 + $0x10] sm:$0xff] %vm714, %v700
    %718 = vst.msk [vmem:[%s3 + $0x18] sm:$0xff] %vm714, %v701
    %719 = vst.msk [vmem:[%s3 + $0x20] sm:$0xff] %vm714, %v702
    %720 = vst.msk [vmem:[%s3 + $0x28] sm:$0xff] %vm714, %v703
    %721 = vst.msk [vmem:[%s3 + $0x30] sm:$0xff] %vm714, %v704
    %722 = vst.msk [vmem:[%s3 + $0x38] sm:$0xff] %vm714, %v705
    %723 = vst.msk [vmem:[%s3 + $0x40] sm:$0xff] %vm714, %v706
    %724 = vst.msk [vmem:[%s3 + $0x48] sm:$0xff] %vm714, %v707
    %725 = vst.msk [vmem:[%s3 + $0x50] sm:$0xff] %vm714, %v708
    %726 = vst.msk [vmem:[%s3 + $0x58] sm:$0xff] %vm714, %v709
    %727 = vst.msk [vmem:[%s3 + $0x60] sm:$0xff] %vm714, %v710
    %728 = vst.msk [vmem:[%s3 + $0x68] sm:$0xff] %vm714, %v711
    %729 = vst.msk [vmem:[%s3 + $0x70] sm:$0xff] %vm714, %v712
    %730 = vst.msk [vmem:[%s3 + $0x78] sm:$0xff] %vm714, %v713
    // Predicated region
    $region18: #{tpu_custom_call.1} parent=1 // pred_check
      _
    $region19: #{tpu_custom_call.1} parent=1 // pred_check_branch
      %732 = sbr.rel (0) target = $region21
    $region20: #{tpu_custom_call.1} parent=1 // pred_region
      _
    $region21: #{tpu_custom_call.1} parent=1 // pred_fallthru
      _
    // Predicated region
    $region22: #{tpu_custom_call.1} parent=1 // pred_check
      _
    $region23: #{tpu_custom_call.1} parent=1 // pred_check_branch
      %734 = sbr.rel (0) target = $region25
    $region24: #{tpu_custom_call.1} parent=1 // pred_region
      _
    $region25: #{tpu_custom_call.1} parent=1 // pred_fallthru
      _
    %735 = vsyncpa [#allocation3], 1

</llo_original>
